<compile_context>
chip_gen: v7x
topology: tpu7x:2x2x1
jax: 0.10.0
libtpu: 0.0.40
codegen_flags: <defaults>
</compile_context>

<pallas_src>
import numpy as np
import jax
import jax.numpy as jnp
from jax.experimental import pallas as pl
from jax.experimental.pallas import tpu as pltpu


def _round_up(x, m):
    return ((x + m - 1) // m) * m


# ---------------------------------------------------------------------------
# Small-N fast path: everything VMEM-resident, single kernel, no grid.
#   out = (A @ relu(A @ XW1 + b1)) @ [Wmu|Wls] + [bmu|bls]
# ---------------------------------------------------------------------------
def fused_kernel(a_ref, xw1_ref, b1_ref, wcat_ref, bcat_ref, out_ref):
    a = a_ref[...]                                                     # bf16 [Np, Np]
    h = jnp.maximum(
        jnp.dot(a, xw1_ref[...], preferred_element_type=jnp.float32)
        + b1_ref[...], 0.0)                                            # f32 [Np, Hp]
    # TODO(synk): training-mode dropout between the two layers not applied (eval identity).
    ah = jnp.dot(a, h.astype(jnp.bfloat16),
                 preferred_element_type=jnp.float32)                   # f32 [Np, Hp]
    out_ref[...] = jnp.dot(ah, wcat_ref[...],
                           preferred_element_type=jnp.float32) + bcat_ref[...]


# ---------------------------------------------------------------------------
# Large-N path, stage 1: h = relu(A @ XW1 + b1), K-tiled over A's columns.
# ---------------------------------------------------------------------------
def stage1_tiled_kernel(a_ref, xw1_ref, b1_ref, h_ref, acc_ref):
    k = pl.program_id(1)

    @pl.when(k == 0)
    def _():
        acc_ref[...] = jnp.zeros_like(acc_ref)

    acc_ref[...] += jnp.dot(a_ref[...], xw1_ref[...],
                            preferred_element_type=jnp.float32)

    @pl.when(k == pl.num_programs(1) - 1)
    def _():
        # Padded node rows end up as relu(b1): harmless, because the padded columns of
        # A_hat are zero and padded output rows are sliced off in the wrapper.
        h_ref[...] = jnp.maximum(acc_ref[...] + b1_ref[...], 0.0).astype(h_ref.dtype)


# ---------------------------------------------------------------------------
# Large-N path, stage 2: out = (A @ h) @ [Wmu|Wls] + [bmu|bls], K-tiled.
# ---------------------------------------------------------------------------
def stage2_tiled_kernel(a_ref, h_ref, wcat_ref, bcat_ref, out_ref, acc_ref):
    k = pl.program_id(1)

    @pl.when(k == 0)
    def _():
        acc_ref[...] = jnp.zeros_like(acc_ref)

    acc_ref[...] += jnp.dot(a_ref[...], h_ref[...],
                            preferred_element_type=jnp.float32)

    @pl.when(k == pl.num_programs(1) - 1)
    def _():
        out_ref[...] = jnp.dot(acc_ref[...], wcat_ref[...],
                               preferred_element_type=jnp.float32) + bcat_ref[...]


def _pick_tile(n_pad, max_tile):
    """Largest multiple-of-128 divisor of n_pad that is <= max_tile and leaves at least
    2 tiles (so both v7x TensorCores get work); falls back to 128."""
    best = 128
    t = 128
    while t <= max_tile and 2 * t <= n_pad:
        if n_pad % t == 0:
            best = t
        t += 128
    return best


# ---------------------------------------------------------------------------
# Wrapper: padding, fused weights, path selection, pallas_call dispatch.
# ---------------------------------------------------------------------------
def vgae_encoder(a_hat, x, params, *, mode="auto"):
    n, _ = x.shape
    hidden = params["w1"].shape[1]
    out_ch = params["wmu"].shape[1]

    f32, bf16 = jnp.float32, jnp.bfloat16

    hp = _round_up(hidden, 128)          # lane-dense hidden width
    op = _round_up(2 * out_ch, 128)      # lane-dense fused (mu|logstd) width
    n_pad = _round_up(max(n, 1), 128)
    pad_n = n_pad - n

    # Precompute XW1 = X @ W1 (tiny matmul in plain JAX): keeps the module's
    # A @ (X @ W1) association and removes a dependent in-kernel MXU pass.
    xw1 = jnp.dot(x.astype(f32), params["w1"].astype(f32))

    # Padded bf16 streaming operands (jnp.pad: no N^2 zeros+scatter temporary).
    a_p = jnp.pad(a_hat.astype(bf16), ((0, pad_n), (0, pad_n)))
    xw1_p = jnp.pad(xw1.astype(bf16), ((0, pad_n), (0, hp - hidden)))

    # Small f32 weights / biases; mu and logstd projections fused along lanes.
    b1_p = jnp.zeros((1, hp), f32).at[:, :hidden].set(params["b1"].astype(f32))
    wcat = (jnp.zeros((hp, op), f32)
            .at[:hidden, :out_ch].set(params["wmu"].astype(f32))
            .at[:hidden, out_ch:2 * out_ch].set(params["wls"].astype(f32)))
    bcat = (jnp.zeros((1, op), f32)
            .at[:, :out_ch].set(params["bmu"].astype(f32))
            .at[:, out_ch:2 * out_ch].set(params["bls"].astype(f32)))

    try:
        vmem_cap = int(pltpu.get_tpu_info().vmem_capacity_bytes)
    except Exception:
        vmem_cap = 64 * 1024 * 1024
    vmem_limit = min(int(vmem_cap * 0.8), 112 * 1024 * 1024)

    # Rough VMEM working set of the fused (no-grid) path.
    fused_bytes = (2 * n_pad * n_pad                # A (bf16)
                   + n_pad * hp * (2 + 4 + 2)       # XW1 bf16 + h f32 + h bf16
                   + 2 * n_pad * op * 4             # ah + out (f32)
                   + (hp * op + hp + op) * 4)       # weights / biases
    if mode == "auto":
        mode = "fused" if fused_bytes <= 0.5 * vmem_cap else "tiled"

    if mode == "fused":
        out = pl.pallas_call(
            fused_kernel,
            out_shape=jax.ShapeDtypeStruct((n_pad, op), f32),
            in_specs=[pl.BlockSpec(memory_space=pltpu.MemorySpace.VMEM)] * 5,
            out_specs=pl.BlockSpec(memory_space=pltpu.MemorySpace.VMEM),
            compiler_params=pltpu.CompilerParams(vmem_limit_bytes=vmem_limit),
        )(a_p, xw1_p, b1_p, wcat, bcat)
    else:
        max_tile = 512 if vmem_cap >= 96 * 1024 * 1024 else 256
        t = _pick_tile(n_pad, max_tile)
        grid = (n_pad // t, n_pad // t)
        cp = pltpu.CompilerParams(
            dimension_semantics=("parallel", "arbitrary"),
            vmem_limit_bytes=vmem_limit,
        )

        # Stage 1: h = relu(A @ XW1 + b1)
        h = pl.pallas_call(
            stage1_tiled_kernel,
            out_shape=jax.ShapeDtypeStruct((n_pad, hp), bf16),
            grid=grid,
            in_specs=[
                pl.BlockSpec((t, t), lambda i, k: (i, k)),     # A tile
                pl.BlockSpec((t, hp), lambda i, k: (k, 0)),    # XW1 K-stripe
                pl.BlockSpec((1, hp), lambda i, k: (0, 0)),    # b1
            ],
            out_specs=pl.BlockSpec((t, hp), lambda i, k: (i, 0)),
            scratch_shapes=[pltpu.VMEM((t, hp), f32)],
            compiler_params=cp,
        )(a_p, xw1_p, b1_p)

        # Stage 2: out = (A @ h) @ [Wmu|Wls] + [bmu|bls]
        out = pl.pallas_call(
            stage2_tiled_kernel,
            out_shape=jax.ShapeDtypeStruct((n_pad, op), f32),
            grid=grid,
            in_specs=[
                pl.BlockSpec((t, t), lambda i, k: (i, k)),     # A tile
                pl.BlockSpec((t, hp), lambda i, k: (k, 0)),    # h K-stripe
                pl.BlockSpec((hp, op), lambda i, k: (0, 0)),   # [Wmu|Wls|0]
                pl.BlockSpec((1, op), lambda i, k: (0, 0)),    # [bmu|bls|0]
            ],
            out_specs=pl.BlockSpec((t, op), lambda i, k: (i, 0)),
            scratch_shapes=[pltpu.VMEM((t, hp), f32)],
            compiler_params=cp,
        )(a_p, h, wcat, bcat)

    mu = out[:n, :out_ch]
    logstd = out[:n, out_ch:2 * out_ch]
    return mu, logstd


# ---------------------------------------------------------------------------
# Glue: GCN normalization and deterministic parameter init (plain numpy / JAX)
# ---------------------------------------------------------------------------
def gcn_normalized_adjacency(edge_index, num_nodes):
    """Dense D^{-1/2}(A+I)D^{-1/2}; A[dst, src] accumulated per edge (scatter-add)."""
    src, dst = edge_index
    a = np.zeros((num_nodes, num_nodes), dtype=np.float32)
    np.add.at(a, (dst, src), 1.0)                        # duplicate edges accumulate
    a += np.eye(num_nodes, dtype=np.float32)             # self-loops
    deg = a.sum(axis=1)
    dinv = 1.0 / np.sqrt(np.maximum(deg, 1e-12))
    a_hat = dinv[:, None] * a * dinv[None, :]
    return jnp.asarray(a_hat, dtype=jnp.float32)


def glorot(key, shape):
    fan_in, fan_out = shape
    limit = float(np.sqrt(6.0 / (fan_in + fan_out)))
    return jax.random.uniform(key, shape, jnp.float32, -limit, limit)


def init_params(key, in_channels, hidden_size, out_channels):
    k1, k2, k3 = jax.random.split(key, 3)
    return {
        "w1":  glorot(k1, (in_channels, hidden_size)),
        "b1":  jnp.zeros((1, hidden_size), jnp.float32),
        "wmu": glorot(k2, (hidden_size, out_channels)),
        "bmu": jnp.zeros((1, out_channels), jnp.float32),
        "wls": glorot(k3, (hidden_size, out_channels)),
        "bls": jnp.zeros((1, out_channels), jnp.float32),
    }


def vgae_reference(a_hat, x, params):
    """Pure-JAX reference (module association)."""
    h = jnp.maximum(a_hat @ (x @ params["w1"]) + params["b1"], 0.0)
    mu = a_hat @ (h @ params["wmu"]) + params["bmu"]
    ls = a_hat @ (h @ params["wls"]) + params["bls"]
    return mu, ls


if __name__ == "__main__":
    in_channels, hidden_size, out_channels = 16, 32, 8
    key = jax.random.PRNGKey(0)
    kx1, kp, kx2 = jax.random.split(key, 3)
    params = init_params(kp, in_channels, hidden_size, out_channels)

    def make_graph(num_nodes, num_edges, seed, kx):
        xs = jax.random.normal(kx, (num_nodes, in_channels), dtype=jnp.float32)
        rng = np.random.default_rng(seed)
        src = rng.integers(0, num_nodes, size=num_edges)
        dst = rng.integers(0, num_nodes, size=num_edges)
        edge_index = np.stack([np.concatenate([src, dst]),
                               np.concatenate([dst, src])], axis=0)
        return gcn_normalized_adjacency(edge_index, num_nodes), xs

    # --- Small graph (N=64): fused single-call, fully VMEM-resident path ---
    a_hat, x = make_graph(64, 128, 0, kx1)
    mu, logstd = vgae_encoder(a_hat, x, params, mode="fused")
    jax.block_until_ready((mu, logstd))
    assert mu.shape == (64, out_channels) and logstd.shape == (64, out_channels)
    assert mu.dtype == jnp.float32 and logstd.dtype == jnp.float32
    mu_ref, ls_ref = vgae_reference(a_hat, x, params)
    np.testing.assert_allclose(np.asarray(mu), np.asarray(mu_ref), rtol=2e-2, atol=2e-2)
    np.testing.assert_allclose(np.asarray(logstd), np.asarray(ls_ref), rtol=2e-2, atol=2e-2)

    # --- Larger graph (N=384): K-tiled two-stage path (3x3 grid of 128 tiles) ---
    a_hat2, x2 = make_graph(384, 768, 1, kx2)
    mu2, ls2 = vgae_encoder(a_hat2, x2, params, mode="tiled")
    jax.block_until_ready((mu2, ls2))
    mu2_ref, ls2_ref = vgae_reference(a_hat2, x2, params)
    np.testing.assert_allclose(np.asarray(mu2), np.asarray(mu2_ref), rtol=2e-2, atol=2e-2)
    np.testing.assert_allclose(np.asarray(ls2), np.asarray(ls2_ref), rtol=2e-2, atol=2e-2)

    print("KERNEL_OK")
</pallas_src>

<mosaic_0001>
module attributes {stable_mosaic.version = 11 : i64} {
  func.func @fused_kernel(%arg0: memref<128x128xbf16, #tpu.memory_space<vmem>>, %arg1: memref<128x128xbf16, #tpu.memory_space<vmem>>, %arg2: memref<1x128xf32, #tpu.memory_space<vmem>>, %arg3: memref<128x128xf32, #tpu.memory_space<vmem>>, %arg4: memref<1x128xf32, #tpu.memory_space<vmem>>, %arg5: memref<128x128xf32, #tpu.memory_space<vmem>>) attributes {dimension_semantics = [], scalar_prefetch = 0 : i64, scratch_operands = 0 : i64, tpu.core_type = #tpu.core_type<tc>} {
    %c0 = arith.constant 0 : index
    %c0_0 = arith.constant 0 : index
    %0 = vector.load %arg0[%c0, %c0_0] : memref<128x128xbf16, #tpu.memory_space<vmem>>, vector<128x128xbf16>
    %c0_1 = arith.constant 0 : index
    %c0_2 = arith.constant 0 : index
    %1 = vector.load %arg1[%c0_1, %c0_2] : memref<128x128xbf16, #tpu.memory_space<vmem>>, vector<128x128xbf16>
    %cst = arith.constant dense<0.000000e+00> : vector<128x128xf32>
    %2 = tpu.matmul %0, %1, %cst {dimension_numbers = #tpu.dot_dimension_numbers<[1], [0], [0], [1], [0, 0, 1, 1], [], []>} : vector<128x128xbf16>, vector<128x128xbf16>, vector<128x128xf32> -> vector<128x128xf32>
    %c0_3 = arith.constant 0 : index
    %c0_4 = arith.constant 0 : index
    %3 = vector.load %arg2[%c0_3, %c0_4] : memref<1x128xf32, #tpu.memory_space<vmem>>, vector<1x128xf32>
    %4 = vector.broadcast %3 : vector<1x128xf32> to vector<128x128xf32>
    %5 = arith.addf %2, %4 : vector<128x128xf32>
    %cst_5 = arith.constant 0.000000e+00 : f32
    %6 = vector.broadcast %cst_5 : f32 to vector<128x128xf32>
    %7 = arith.maximumf %5, %6 : vector<128x128xf32>
    %8 = arith.truncf %7 : vector<128x128xf32> to vector<128x128xbf16>
    %cst_6 = arith.constant dense<0.000000e+00> : vector<128x128xf32>
    %9 = tpu.matmul %0, %8, %cst_6 {dimension_numbers = #tpu.dot_dimension_numbers<[1], [0], [0], [1], [0, 0, 1, 1], [], []>} : vector<128x128xbf16>, vector<128x128xbf16>, vector<128x128xf32> -> vector<128x128xf32>
    %c0_7 = arith.constant 0 : index
    %c0_8 = arith.constant 0 : index
    %10 = vector.load %arg3[%c0_7, %c0_8] : memref<128x128xf32, #tpu.memory_space<vmem>>, vector<128x128xf32>
    %cst_9 = arith.constant dense<0.000000e+00> : vector<128x128xf32>
    %11 = tpu.matmul %9, %10, %cst_9 {dimension_numbers = #tpu.dot_dimension_numbers<[1], [0], [0], [1], [0, 0, 1, 1], [], []>} : vector<128x128xf32>, vector<128x128xf32>, vector<128x128xf32> -> vector<128x128xf32>
    %c0_10 = arith.constant 0 : index
    %c0_11 = arith.constant 0 : index
    %12 = vector.load %arg4[%c0_10, %c0_11] : memref<1x128xf32, #tpu.memory_space<vmem>>, vector<1x128xf32>
    %13 = vector.broadcast %12 : vector<1x128xf32> to vector<128x128xf32>
    %14 = arith.addf %11, %13 : vector<128x128xf32>
    %c0_12 = arith.constant 0 : index
    %c0_13 = arith.constant 0 : index
    %15 = vector.load %arg5[%c0_12, %c0_13] : memref<128x128xf32, #tpu.memory_space<vmem>>, vector<128x128xf32>
    tpu.vector_store %arg5[%c0_12, %c0_13], %14 {strides = array<i32>} : memref<128x128xf32, #tpu.memory_space<vmem>>, vector<128x128xf32>,
    return
  }
}

</mosaic_0001>

<llo_original>
// kernel: tpu_custom_call.1
$region0: #{tpu_custom_call.1}
  #allocation0 [shape = 'u32[]', space=smem, size = 0x4, offset = 0x4, fixed_abs, tag = 'smem constant byte address 0x4 - core index']
  #allocation1 [shape = 'u32[144,128]{1,0:T(1,128)}', space=vmem, size = 0x12000, scoped, tag = 'internal scratch']
  %s0 = inlined_call_operand.hbm [shape: bf16[128,128], index: 0, kind: input, shape index: {}]
  %s1 = inlined_call_operand.hbm [shape: bf16[128,128], index: 1, kind: input, shape index: {}]
  %s2 = inlined_call_operand.vmem [shape: f32[1,128], index: 2, kind: input, shape index: {}]
  %s3 = inlined_call_operand.hbm [shape: f32[128,128], index: 3, kind: input, shape index: {}]
  %s4 = inlined_call_operand.vmem [shape: f32[1,128], index: 4, kind: input, shape index: {}]
  %s5 = inlined_call_operand.hbm [shape: f32[128,128], index: 5, kind: output, shape index: {}]
  %s6 = sld [smem:[#allocation0]]
  $region42: #{tpu_custom_call.1} parent=0
    _
  %s8 = ssub.s32 1, %s6
  %s9 = scalar_select 0, %s8, %s6
  $region1: #{tpu_custom_call.1} parent=0
    #allocation2 [shape = 'u8[32768]{0}', space=vmem, size = 0x8000, scoped, tag = 'input window, operand 0, single buffered']
    #allocation3 [shape = 's32[1]{0}', space=sflag, size = 0x4, scoped, tag = 'scoped memory for tpu_custom_call.1']
    #allocation4 [shape = 's32[1]{0}', space=sflag, size = 0x4, scoped, tag = 'scoped memory for tpu_custom_call.1']
    #allocation5 [shape = 'u8[32768]{0}', space=vmem, size = 0x8000, scoped, tag = 'input window, operand 1, single buffered']
    #allocation6 [shape = 's32[1]{0}', space=sflag, size = 0x4, scoped, tag = 'scoped memory for tpu_custom_call.1']
    #allocation7 [shape = 'u8[65536]{0}', space=vmem, size = 0x10000, scoped, tag = 'input window, operand 3, single buffered']
    #allocation8 [shape = 'u8[65536]{0}', space=vmem, size = 0x10000, scoped, tag = 'output window, operand 0, single buffered']
    %10 = vsyncpa [#allocation3], 0
    %11 = vsyncpa [#allocation6], 0
    %12 = vsyncpa [#allocation4], 0
    // Predicated region
    $region2: #{tpu_custom_call.1} parent=1 // pred_check
      _
    $region3: #{tpu_custom_call.1} parent=1 // pred_check_branch
      %14 = sbr.rel (0) target = $region5
    $region4: #{tpu_custom_call.1} parent=1 // pred_region
      %s16 = ssub.s32 1024, 1024
      %17 = vsyncadd [#allocation3], %s16
      %s18 = sshll.u32 [#allocation2], 4
      %s19 = int_to_ptr.vmem [resolvable:$true] %s18
      %24 = dma.hbm_to_vmem [thread:$0]  %s0, 1024, %s19, [#allocation3], 64, 64, 4
    $region5: #{tpu_custom_call.1} parent=1 // pred_fallthru
      _
    // Predicated region
    $region6: #{tpu_custom_call.1} parent=1 // pred_check
      _
    $region7: #{tpu_custom_call.1} parent=1 // pred_check_branch
      %26 = sbr.rel (0) target = $region9
    $region8: #{tpu_custom_call.1} parent=1 // pred_region
      %s28 = ssub.s32 1024, 1024
      %29 = vsyncadd [#allocation6], %s28
      %s30 = sshll.u32 [#allocation5], 4
      %s31 = int_to_ptr.vmem [resolvable:$true] %s30
      %36 = dma.hbm_to_vmem [thread:$0]  %s1, 1024, %s31, [#allocation6], 64, 64, 4
    $region9: #{tpu_custom_call.1} parent=1 // pred_fallthru
      _
    // Predicated region
    $region10: #{tpu_custom_call.1} parent=1 // pred_check
      _
    $region11: #{tpu_custom_call.1} parent=1 // pred_check_branch
      %38 = sbr.rel (0) target = $region13
    $region12: #{tpu_custom_call.1} parent=1 // pred_region
      _
    $region13: #{tpu_custom_call.1} parent=1 // pred_fallthru
      _
    // Predicated region
    $region14: #{tpu_custom_call.1} parent=1 // pred_check
      _
    $region15: #{tpu_custom_call.1} parent=1 // pred_check_branch
      %40 = sbr.rel (0) target = $region17
    $region16: #{tpu_custom_call.1} parent=1 // pred_region
      %s42 = ssub.s32 2048, 2048
      %43 = vsyncadd [#allocation6], %s42
      %s44 = sshll.u32 [#allocation7], 4
      %s45 = int_to_ptr.vmem [resolvable:$true] %s44
      %50 = dma.hbm_to_vmem [thread:$0]  %s3, 2048, %s45, [#allocation6], 128, 128, 8
    $region17: #{tpu_custom_call.1} parent=1 // pred_fallthru
      _
    // Predicated region
    $region18: #{tpu_custom_call.1} parent=1 // pred_check
      _
    $region19: #{tpu_custom_call.1} parent=1 // pred_check_branch
      %52 = sbr.rel (0) target = $region21
    $region20: #{tpu_custom_call.1} parent=1 // pred_region
      _
    $region21: #{tpu_custom_call.1} parent=1 // pred_fallthru
      _
    // Predicated region
    $region22: #{tpu_custom_call.1} parent=1 // pred_check
      _
    $region23: #{tpu_custom_call.1} parent=1 // pred_check_branch
      %54 = sbr.rel (0) target = $region25
    $region24: #{tpu_custom_call.1} parent=1 // pred_region
      %55 = dma.done [#allocation3], 1024
    $region25: #{tpu_custom_call.1} parent=1 // pred_fallthru
      _
    // Predicated region
    $region26: #{tpu_custom_call.1} parent=1 // pred_check
      _
    $region27: #{tpu_custom_call.1} parent=1 // pred_check_branch
      %57 = sbr.rel (0) target = $region29
    $region28: #{tpu_custom_call.1} parent=1 // pred_region
      %58 = dma.done [#allocation6], 1024
    $region29: #{tpu_custom_call.1} parent=1 // pred_fallthru
      _
    // Predicated region
    $region30: #{tpu_custom_call.1} parent=1 // pred_check
      _
    $region31: #{tpu_custom_call.1} parent=1 // pred_check_branch
      %60 = sbr.rel (0) target = $region33
    $region32: #{tpu_custom_call.1} parent=1 // pred_region
      %61 = dma.done [#allocation6], 2048
    $region33: #{tpu_custom_call.1} parent=1 // pred_fallthru
      _
    %v63 = vld [vmem:[#allocation2] sm:$0xf]
    %v64 = vld [vmem:[#allocation2 + $0x4] sm:$0xf]
    %v65 = vld [vmem:[#allocation2 + $0x8] sm:$0xf]
    %v66 = vld [vmem:[#allocation2 + $0xc] sm:$0xf]
    %v67 = vld [vmem:[#allocation2 + $0x10] sm:$0xf]
    %v68 = vld [vmem:[#allocation2 + $0x14] sm:$0xf]
    %v69 = vld [vmem:[#allocation2 + $0x18] sm:$0xf]
    %v70 = vld [vmem:[#allocation2 + $0x1c] sm:$0xf]
    %v71 = vld [vmem:[#allocation2 + $0x20] sm:$0xf]
    %v72 = vld [vmem:[#allocation2 + $0x24] sm:$0xf]
    %v73 = vld [vmem:[#allocation2 + $0x28] sm:$0xf]
    %v74 = vld [vmem:[#allocation2 + $0x2c] sm:$0xf]
    %v75 = vld [vmem:[#allocation2 + $0x30] sm:$0xf]
    %v76 = vld [vmem:[#allocation2 + $0x34] sm:$0xf]
    %v77 = vld [vmem:[#allocation2 + $0x38] sm:$0xf]
    %v78 = vld [vmem:[#allocation2 + $0x3c] sm:$0xf]
    %v79 = vld [vmem:[#allocation5] sm:$0xf]
    %v80 = vld [vmem:[#allocation5 + $0x4] sm:$0xf]
    %v81 = vld [vmem:[#allocation5 + $0x8] sm:$0xf]
    %v82 = vld [vmem:[#allocation5 + $0xc] sm:$0xf]
    %v83 = vld [vmem:[#allocation5 + $0x10] sm:$0xf]
    %v84 = vld [vmem:[#allocation5 + $0x14] sm:$0xf]
    %v85 = vld [vmem:[#allocation5 + $0x18] sm:$0xf]
    %v86 = vld [vmem:[#allocation5 + $0x1c] sm:$0xf]
    %v87 = vld [vmem:[#allocation5 + $0x20] sm:$0xf]
    %v88 = vld [vmem:[#allocation5 + $0x24] sm:$0xf]
    %v89 = vld [vmem:[#allocation5 + $0x28] sm:$0xf]
    %v90 = vld [vmem:[#allocation5 + $0x2c] sm:$0xf]
    %v91 = vld [vmem:[#allocation5 + $0x30] sm:$0xf]
    %v92 = vld [vmem:[#allocation5 + $0x34] sm:$0xf]
    %v93 = vld [vmem:[#allocation5 + $0x38] sm:$0xf]
    %v94 = vld [vmem:[#allocation5 + $0x3c] sm:$0xf]
    %v95 = vld [vmem:[%s2] sm:$0x1]
    %v97 = vlaneseq
    %v98 = vshrl.u32 %v97, 7
    %v99 = vsub.s32 0, %v98
    %v100 = vrot.slane %v95, %v99
    %v118 = vunpack.c.l.b16 %v63
    %v119 = vunpack.c.l.b16 %v64
    %v120 = vunpack.c.l.b16 %v65
    %v121 = vunpack.c.l.b16 %v66
    %v122 = vunpack.c.l.b16 %v67
    %v123 = vunpack.c.l.b16 %v68
    %v124 = vunpack.c.l.b16 %v69
    %v125 = vunpack.c.l.b16 %v70
    %v126 = vunpack.c.l.b16 %v71
    %v127 = vunpack.c.l.b16 %v72
    %v128 = vunpack.c.l.b16 %v73
    %v129 = vunpack.c.l.b16 %v74
    %v130 = vunpack.c.l.b16 %v75
    %v131 = vunpack.c.l.b16 %v76
    %v132 = vunpack.c.l.b16 %v77
    %v133 = vunpack.c.l.b16 %v78
    %v134 = vpack.c.b16 %v119, %v118
    %v135 = vpack.c.b16 %v121, %v120
    %v136 = vpack.c.b16 %v123, %v122
    %v137 = vpack.c.b16 %v125, %v124
    %v138 = vpack.c.b16 %v127, %v126
    %v139 = vpack.c.b16 %v129, %v128
    %v140 = vpack.c.b16 %v131, %v130
    %v141 = vpack.c.b16 %v133, %v132
    %v166 = vunpack.c.l.b16 %v79
    %v167 = vunpack.c.l.b16 %v80
    %v168 = vunpack.c.l.b16 %v81
    %v169 = vunpack.c.l.b16 %v82
    %v170 = vunpack.c.l.b16 %v83
    %v171 = vunpack.c.l.b16 %v84
    %v172 = vunpack.c.l.b16 %v85
    %v173 = vunpack.c.l.b16 %v86
    %v174 = vunpack.c.l.b16 %v87
    %v175 = vunpack.c.l.b16 %v88
    %v176 = vunpack.c.l.b16 %v89
    %v177 = vunpack.c.l.b16 %v90
    %v178 = vunpack.c.l.b16 %v91
    %v179 = vunpack.c.l.b16 %v92
    %v180 = vunpack.c.l.b16 %v93
    %v181 = vunpack.c.l.b16 %v94
    %v182 = vpack.c.b16 %v167, %v166
    %v183 = vpack.c.b16 %v169, %v168
    %v184 = vpack.c.b16 %v171, %v170
    %v185 = vpack.c.b16 %v173, %v172
    %v186 = vpack.c.b16 %v175, %v174
    %v187 = vpack.c.b16 %v177, %v176
    %v188 = vpack.c.b16 %v179, %v178
    %v189 = vpack.c.b16 %v181, %v180
    %198 = vmatprep.subr.bf16.mxu0 0
    %199 = vmatpush1.bf16.msra.mxu0 %v182
    %200 = vmatprep.subr.bf16.mxu0 0
    %201 = vmatpush1.bf16.msra.mxu0 %v183
    %202 = vmatprep.subr.bf16.mxu0 0
    %203 = vmatpush1.bf16.msra.mxu0 %v184
    %204 = vmatprep.subr.bf16.mxu0 0
    %205 = vmatpush1.bf16.msra.mxu0 %v185
    %206 = vmatprep.subr.bf16.mxu0 0
    %207 = vmatpush1.bf16.msra.mxu0 %v186
    %208 = vmatprep.subr.bf16.mxu0 0
    %209 = vmatpush1.bf16.msra.mxu0 %v187
    %210 = vmatprep.subr.bf16.mxu0 0
    %211 = vmatpush1.bf16.msra.mxu0 %v188
    %212 = vmatprep.subr.bf16.mxu0 0
    %213 = vmatpush1.bf16.msra.mxu0 %v189
    %214 = vmatprep.subr.bf16.mxu0 0
    %215 = vmatpush1.bf16.msra.mxu0 0
    %216 = vmatprep.subr.bf16.mxu0 0
    %217 = vmatpush1.bf16.msra.mxu0 0
    %218 = vmatprep.subr.bf16.mxu0 0
    %219 = vmatpush1.bf16.msra.mxu0 0
    %220 = vmatprep.subr.bf16.mxu0 0
    %221 = vmatpush1.bf16.msra.mxu0 0
    %222 = vmatprep.subr.bf16.mxu0 0
    %223 = vmatpush1.bf16.msra.mxu0 0
    %224 = vmatprep.subr.bf16.mxu0 0
    %225 = vmatpush1.bf16.msra.mxu0 0
    %226 = vmatprep.subr.bf16.mxu0 0
    %227 = vmatpush1.bf16.msra.mxu0 0
    %228 = vmatprep.subr.bf16.mxu0 0
    %229 = vmatpush1.bf16.msra.mxu0 0
    %230 = vmatprep.mubr.bf16.mxu0 0
    %231 = vmatmul.mubr.bf16.gmra.mrb[0].mxu0 %v134
    %v232 = vpop.f32.mrb[0].mxu0
    %v233 = vadd.f32 %v100, %v232
    %v234 = vpop.f32.mrb[0].mxu0
    %v235 = vpop.f32.mrb[0].mxu0
    %v236 = vadd.f32 %v100, %v235
    %v237 = vpop.f32.mrb[0].mxu0
    %238 = vmatprep.mubr.bf16.mxu0 0
    %239 = vmatmul.mubr.bf16.gmra.mrb[0].mxu0 %v135
    %v240 = vpop.f32.mrb[0].mxu0
    %v241 = vadd.f32 %v100, %v240
    %v242 = vpop.f32.mrb[0].mxu0
    %v243 = vpop.f32.mrb[0].mxu0
    %v244 = vadd.f32 %v100, %v243
    %v245 = vpop.f32.mrb[0].mxu0
    %246 = vmatprep.mubr.bf16.mxu0 0
    %247 = vmatmul.mubr.bf16.gmra.mrb[0].mxu0 %v136
    %v248 = vpop.f32.mrb[0].mxu0
    %v249 = vadd.f32 %v100, %v248
    %v250 = vpop.f32.mrb[0].mxu0
    %v251 = vpop.f32.mrb[0].mxu0
    %v252 = vadd.f32 %v100, %v251
    %v253 = vpop.f32.mrb[0].mxu0
    %254 = vmatprep.mubr.bf16.mxu0 0
    %255 = vmatmul.mubr.bf16.gmra.mrb[0].mxu0 %v137
    %v256 = vpop.f32.mrb[0].mxu0
    %v257 = vadd.f32 %v100, %v256
    %v258 = vpop.f32.mrb[0].mxu0
    %v259 = vpop.f32.mrb[0].mxu0
    %v260 = vadd.f32 %v100, %v259
    %v261 = vpop.f32.mrb[0].mxu0
    %262 = vmatprep.mubr.bf16.mxu0 0
    %263 = vmatmul.mubr.bf16.gmra.mrb[0].mxu0 %v138
    %v264 = vpop.f32.mrb[0].mxu0
    %v265 = vadd.f32 %v100, %v264
    %v266 = vpop.f32.mrb[0].mxu0
    %v267 = vpop.f32.mrb[0].mxu0
    %v268 = vadd.f32 %v100, %v267
    %v269 = vpop.f32.mrb[0].mxu0
    %270 = vmatprep.mubr.bf16.mxu0 0
    %271 = vmatmul.mubr.bf16.gmra.mrb[0].mxu0 %v139
    %v272 = vpop.f32.mrb[0].mxu0
    %v273 = vadd.f32 %v100, %v272
    %v274 = vpop.f32.mrb[0].mxu0
    %v275 = vpop.f32.mrb[0].mxu0
    %v276 = vadd.f32 %v100, %v275
    %v277 = vpop.f32.mrb[0].mxu0
    %278 = vmatprep.mubr.bf16.mxu0 0
    %279 = vmatmul.mubr.bf16.gmra.mrb[0].mxu0 %v140
    %v280 = vpop.f32.mrb[0].mxu0
    %v281 = vadd.f32 %v100, %v280
    %v282 = vpop.f32.mrb[0].mxu0
    %v283 = vpop.f32.mrb[0].mxu0
    %v284 = vadd.f32 %v100, %v283
    %v285 = vpop.f32.mrb[0].mxu0
    %286 = vmatprep.mubr.bf16.mxu0 0
    %287 = vmatmul.mubr.bf16.gmra.mrb[0].mxu0 %v141
    %v288 = vpop.f32.mrb[0].mxu0
    %v289 = vadd.f32 %v100, %v288
    %v290 = vpop.f32.mrb[0].mxu0
    %v291 = vpop.f32.mrb[0].mxu0
    %v292 = vadd.f32 %v100, %v291
    %v293 = vpop.f32.mrb[0].mxu0
    %294 = vdwg.mxu0
    %v295 = vmax.f32 %v233, 0.0
    %v296 = vmax.f32 %v236, 0.0
    %v297 = vmax.f32 %v241, 0.0
    %v298 = vmax.f32 %v244, 0.0
    %v299 = vmax.f32 %v249, 0.0
    %v300 = vmax.f32 %v252, 0.0
    %v301 = vmax.f32 %v257, 0.0
    %v302 = vmax.f32 %v260, 0.0
    %v303 = vmax.f32 %v265, 0.0
    %v304 = vmax.f32 %v268, 0.0
    %v305 = vmax.f32 %v273, 0.0
    %v306 = vmax.f32 %v276, 0.0
    %v307 = vmax.f32 %v281, 0.0
    %v308 = vmax.f32 %v284, 0.0
    %v309 = vmax.f32 %v289, 0.0
    %v310 = vmax.f32 %v292, 0.0
    %v311 = vpack.c.bf16 %v296, %v295
    %v312 = vpack.c.bf16 %v298, %v297
    %v313 = vpack.c.bf16 %v300, %v299
    %v314 = vpack.c.bf16 %v302, %v301
    %v315 = vpack.c.bf16 %v304, %v303
    %v316 = vpack.c.bf16 %v306, %v305
    %v317 = vpack.c.bf16 %v308, %v307
    %v318 = vpack.c.bf16 %v310, %v309
    %319 = vmatprep.subr.bf16.mxu0 0
    %320 = vmatpush1.bf16.msra.mxu0 %v311
    %321 = vmatprep.subr.bf16.mxu0 0
    %322 = vmatpush1.bf16.msra.mxu0 %v312
    %323 = vmatprep.subr.bf16.mxu0 0
    %324 = vmatpush1.bf16.msra.mxu0 %v313
    %325 = vmatprep.subr.bf16.mxu0 0
    %326 = vmatpush1.bf16.msra.mxu0 %v314
    %327 = vmatprep.subr.bf16.mxu0 0
    %328 = vmatpush1.bf16.msra.mxu0 %v315
    %329 = vmatprep.subr.bf16.mxu0 0
    %330 = vmatpush1.bf16.msra.mxu0 %v316
    %331 = vmatprep.subr.bf16.mxu0 0
    %332 = vmatpush1.bf16.msra.mxu0 %v317
    %333 = vmatprep.subr.bf16.mxu0 0
    %334 = vmatpush1.bf16.msra.mxu0 %v318
    %335 = vmatprep.subr.bf16.mxu0 0
    %336 = vmatpush1.bf16.msra.mxu0 0
    %337 = vmatprep.subr.bf16.mxu0 0
    %338 = vmatpush1.bf16.msra.mxu0 0
    %339 = vmatprep.subr.bf16.mxu0 0
    %340 = vmatpush1.bf16.msra.mxu0 0
    %341 = vmatprep.subr.bf16.mxu0 0
    %342 = vmatpush1.bf16.msra.mxu0 0
    %343 = vmatprep.subr.bf16.mxu0 0
    %344 = vmatpush1.bf16.msra.mxu0 0
    %345 = vmatprep.subr.bf16.mxu0 0
    %346 = vmatpush1.bf16.msra.mxu0 0
    %347 = vmatprep.subr.bf16.mxu0 0
    %348 = vmatpush1.bf16.msra.mxu0 0
    %349 = vmatprep.subr.bf16.mxu0 0
    %350 = vmatpush1.bf16.msra.mxu0 0
    %351 = vmatprep.mubr.bf16.mxu0 0
    %352 = vmatmul.mubr.bf16.gmra.mrb[0].mxu0 %v134
    %v353 = vpop.f32.mrb[0].mxu0
    %v354 = vadd.f32 0.0, %v353
    %v355 = vpop.f32.mrb[0].mxu0
    %v356 = vpop.f32.mrb[0].mxu0
    %v357 = vadd.f32 0.0, %v356
    %v358 = vpop.f32.mrb[0].mxu0
    %359 = vmatprep.mubr.bf16.mxu0 0
    %360 = vmatmul.mubr.bf16.gmra.mrb[0].mxu0 %v135
    %v361 = vpop.f32.mrb[0].mxu0
    %v362 = vadd.f32 0.0, %v361
    %v363 = vpop.f32.mrb[0].mxu0
    %v364 = vpop.f32.mrb[0].mxu0
    %v365 = vadd.f32 0.0, %v364
    %v366 = vpop.f32.mrb[0].mxu0
    %367 = vmatprep.mubr.bf16.mxu0 0
    %368 = vmatmul.mubr.bf16.gmra.mrb[0].mxu0 %v136
    %v369 = vpop.f32.mrb[0].mxu0
    %v370 = vadd.f32 0.0, %v369
    %v371 = vpop.f32.mrb[0].mxu0
    %v372 = vpop.f32.mrb[0].mxu0
    %v373 = vadd.f32 0.0, %v372
    %v374 = vpop.f32.mrb[0].mxu0
    %375 = vmatprep.mubr.bf16.mxu0 0
    %376 = vmatmul.mubr.bf16.gmra.mrb[0].mxu0 %v137
    %v377 = vpop.f32.mrb[0].mxu0
    %v378 = vadd.f32 0.0, %v377
    %v379 = vpop.f32.mrb[0].mxu0
    %v380 = vpop.f32.mrb[0].mxu0
    %v381 = vadd.f32 0.0, %v380
    %v382 = vpop.f32.mrb[0].mxu0
    %383 = vmatprep.mubr.bf16.mxu0 0
    %384 = vmatmul.mubr.bf16.gmra.mrb[0].mxu0 %v138
    %v385 = vpop.f32.mrb[0].mxu0
    %v386 = vadd.f32 0.0, %v385
    %v387 = vpop.f32.mrb[0].mxu0
    %v388 = vpop.f32.mrb[0].mxu0
    %v389 = vadd.f32 0.0, %v388
    %v390 = vpop.f32.mrb[0].mxu0
    %391 = vmatprep.mubr.bf16.mxu0 0
    %392 = vmatmul.mubr.bf16.gmra.mrb[0].mxu0 %v139
    %v393 = vpop.f32.mrb[0].mxu0
    %v394 = vadd.f32 0.0, %v393
    %v395 = vpop.f32.mrb[0].mxu0
    %v396 = vpop.f32.mrb[0].mxu0
    %v397 = vadd.f32 0.0, %v396
    %v398 = vpop.f32.mrb[0].mxu0
    %399 = vmatprep.mubr.bf16.mxu0 0
    %400 = vmatmul.mubr.bf16.gmra.mrb[0].mxu0 %v140
    %v401 = vpop.f32.mrb[0].mxu0
    %v402 = vadd.f32 0.0, %v401
    %v403 = vpop.f32.mrb[0].mxu0
    %v404 = vpop.f32.mrb[0].mxu0
    %v405 = vadd.f32 0.0, %v404
    %v406 = vpop.f32.mrb[0].mxu0
    %407 = vmatprep.mubr.bf16.mxu0 0
    %408 = vmatmul.mubr.bf16.gmra.mrb[0].mxu0 %v141
    %v409 = vpop.f32.mrb[0].mxu0
    %v410 = vadd.f32 0.0, %v409
    %v411 = vpop.f32.mrb[0].mxu0
    %v412 = vpop.f32.mrb[0].mxu0
    %v413 = vadd.f32 0.0, %v412
    %v414 = vpop.f32.mrb[0].mxu0
    %415 = vdwg.mxu0
    %v416 = vld [vmem:[#allocation7] sm:$0xff]
    %v417 = vld [vmem:[#allocation7 + $0x8] sm:$0xff]
    %v418 = vld [vmem:[#allocation7 + $0x10] sm:$0xff]
    %v419 = vld [vmem:[#allocation7 + $0x18] sm:$0xff]
    %v420 = vld [vmem:[#allocation7 + $0x20] sm:$0xff]
    %v421 = vld [vmem:[#allocation7 + $0x28] sm:$0xff]
    %v422 = vld [vmem:[#allocation7 + $0x30] sm:$0xff]
    %v423 = vld [vmem:[#allocation7 + $0x38] sm:$0xff]
    %v424 = vld [vmem:[#allocation7 + $0x40] sm:$0xff]
    %v425 = vld [vmem:[#allocation7 + $0x48] sm:$0xff]
    %v426 = vld [vmem:[#allocation7 + $0x50] sm:$0xff]
    %v427 = vld [vmem:[#allocation7 + $0x58] sm:$0xff]
    %v428 = vld [vmem:[#allocation7 + $0x60] sm:$0xff]
    %v429 = vld [vmem:[#allocation7 + $0x68] sm:$0xff]
    %v430 = vld [vmem:[#allocation7 + $0x70] sm:$0xff]
    %v431 = vld [vmem:[#allocation7 + $0x78] sm:$0xff]
    %v432 = vld [vmem:[%s4] sm:$0x1]
    %v434 = vlaneseq
    %v435 = vshrl.u32 %v434, 7
    %v436 = vsub.s32 0, %v435
    %v437 = vrot.slane %v432, %v436
    %439 = vmatprep.subr.mxu0 0.0
    %440 = vmatpush1.msra.mxu0 %v416
    %441 = vmatprep.subr.mxu0 0.0
    %442 = vmatpush1.msra.mxu0 %v417
    %443 = vmatprep.subr.mxu0 0.0
    %444 = vmatpush1.msra.mxu0 %v418
    %445 = vmatprep.subr.mxu0 0.0
    %446 = vmatpush1.msra.mxu0 %v419
    %447 = vmatprep.subr.mxu0 0.0
    %448 = vmatpush1.msra.mxu0 %v420
    %449 = vmatprep.subr.mxu0 0.0
    %450 = vmatpush1.msra.mxu0 %v421
    %451 = vmatprep.subr.mxu0 0.0
    %452 = vmatpush1.msra.mxu0 %v422
    %453 = vmatprep.subr.mxu0 0.0
    %454 = vmatpush1.msra.mxu0 %v423
    %455 = vmatprep.subr.mxu0 0.0
    %456 = vmatpush1.msra.mxu0 %v424
    %457 = vmatprep.subr.mxu0 0.0
    %458 = vmatpush1.msra.mxu0 %v425
    %459 = vmatprep.subr.mxu0 0.0
    %460 = vmatpush1.msra.mxu0 %v426
    %461 = vmatprep.subr.mxu0 0.0
    %462 = vmatpush1.msra.mxu0 %v427
    %463 = vmatprep.subr.mxu0 0.0
    %464 = vmatpush1.msra.mxu0 %v428
    %465 = vmatprep.subr.mxu0 0.0
    %466 = vmatpush1.msra.mxu0 %v429
    %467 = vmatprep.subr.mxu0 0.0
    %468 = vmatpush1.msra.mxu0 %v430
    %469 = vmatprep.subr.mxu0 0.0
    %470 = vmatpush1.msra.mxu0 %v431
    %471 = vmatprep.subr.mxu0 0.0
    %472 = vmatpush1.msra.mxu0 0.0
    %473 = vmatprep.subr.mxu0 0.0
    %474 = vmatpush1.msra.mxu0 0.0
    %475 = vmatprep.subr.mxu0 0.0
    %476 = vmatpush1.msra.mxu0 0.0
    %477 = vmatprep.subr.mxu0 0.0
    %478 = vmatpush1.msra.mxu0 0.0
    %479 = vmatprep.subr.mxu0 0.0
    %480 = vmatpush1.msra.mxu0 0.0
    %481 = vmatprep.subr.mxu0 0.0
    %482 = vmatpush1.msra.mxu0 0.0
    %483 = vmatprep.subr.mxu0 0.0
    %484 = vmatpush1.msra.mxu0 0.0
    %485 = vmatprep.subr.mxu0 0.0
    %486 = vmatpush1.msra.mxu0 0.0
    %487 = vmatprep.subr.mxu0 0.0
    %488 = vmatpush1.msra.mxu0 0.0
    %489 = vmatprep.subr.mxu0 0.0
    %490 = vmatpush1.msra.mxu0 0.0
    %491 = vmatprep.subr.mxu0 0.0
    %492 = vmatpush1.msra.mxu0 0.0
    %493 = vmatprep.subr.mxu0 0.0
    %494 = vmatpush1.msra.mxu0 0.0
    %495 = vmatprep.subr.mxu0 0.0
    %496 = vmatpush1.msra.mxu0 0.0
    %497 = vmatprep.subr.mxu0 0.0
    %498 = vmatpush1.msra.mxu0 0.0
    %499 = vmatprep.subr.mxu0 0.0
    %500 = vmatpush1.msra.mxu0 0.0
    %501 = vmatprep.subr.mxu0 0.0
    %502 = vmatpush1.msra.mxu0 0.0
    %503 = vmatprep.mubr.f32.mxu0 0.0
    %504 = vmatmul.mubr.f32.gmra.mrb[0].mxu0 %v354
    %v505 = vpop.f32.mrb[0].mxu0
    %v506 = vadd.f32 %v437, %v505
    %v507 = vpop.f32.mrb[0].mxu0
    %508 = vmatprep.mubr.f32.mxu0 0.0
    %509 = vmatmul.mubr.f32.gmra.mrb[0].mxu0 %v357
    %v510 = vpop.f32.mrb[0].mxu0
    %v511 = vadd.f32 %v437, %v510
    %v512 = vpop.f32.mrb[0].mxu0
    %513 = vmatprep.mubr.f32.mxu0 0.0
    %514 = vmatmul.mubr.f32.gmra.mrb[0].mxu0 %v362
    %v515 = vpop.f32.mrb[0].mxu0
    %v516 = vadd.f32 %v437, %v515
    %v517 = vpop.f32.mrb[0].mxu0
    %518 = vmatprep.mubr.f32.mxu0 0.0
    %519 = vmatmul.mubr.f32.gmra.mrb[0].mxu0 %v365
    %v520 = vpop.f32.mrb[0].mxu0
    %v521 = vadd.f32 %v437, %v520
    %v522 = vpop.f32.mrb[0].mxu0
    %523 = vmatprep.mubr.f32.mxu0 0.0
    %524 = vmatmul.mubr.f32.gmra.mrb[0].mxu0 %v370
    %v525 = vpop.f32.mrb[0].mxu0
    %v526 = vadd.f32 %v437, %v525
    %v527 = vpop.f32.mrb[0].mxu0
    %528 = vmatprep.mubr.f32.mxu0 0.0
    %529 = vmatmul.mubr.f32.gmra.mrb[0].mxu0 %v373
    %v530 = vpop.f32.mrb[0].mxu0
    %v531 = vadd.f32 %v437, %v530
    %v532 = vpop.f32.mrb[0].mxu0
    %533 = vmatprep.mubr.f32.mxu0 0.0
    %534 = vmatmul.mubr.f32.gmra.mrb[0].mxu0 %v378
    %v535 = vpop.f32.mrb[0].mxu0
    %v536 = vadd.f32 %v437, %v535
    %v537 = vpop.f32.mrb[0].mxu0
    %538 = vmatprep.mubr.f32.mxu0 0.0
    %539 = vmatmul.mubr.f32.gmra.mrb[0].mxu0 %v381
    %v540 = vpop.f32.mrb[0].mxu0
    %v541 = vadd.f32 %v437, %v540
    %v542 = vpop.f32.mrb[0].mxu0
    %543 = vmatprep.mubr.f32.mxu0 0.0
    %544 = vmatmul.mubr.f32.gmra.mrb[0].mxu0 %v386
    %v545 = vpop.f32.mrb[0].mxu0
    %v546 = vadd.f32 %v437, %v545
    %v547 = vpop.f32.mrb[0].mxu0
    %548 = vmatprep.mubr.f32.mxu0 0.0
    %549 = vmatmul.mubr.f32.gmra.mrb[0].mxu0 %v389
    %v550 = vpop.f32.mrb[0].mxu0
    %v551 = vadd.f32 %v437, %v550
    %v552 = vpop.f32.mrb[0].mxu0
    %553 = vmatprep.mubr.f32.mxu0 0.0
    %554 = vmatmul.mubr.f32.gmra.mrb[0].mxu0 %v394
    %v555 = vpop.f32.mrb[0].mxu0
    %v556 = vadd.f32 %v437, %v555
    %v557 = vpop.f32.mrb[0].mxu0
    %558 = vmatprep.mubr.f32.mxu0 0.0
    %559 = vmatmul.mubr.f32.gmra.mrb[0].mxu0 %v397
    %v560 = vpop.f32.mrb[0].mxu0
    %v561 = vadd.f32 %v437, %v560
    %v562 = vpop.f32.mrb[0].mxu0
    %563 = vmatprep.mubr.f32.mxu0 0.0
    %564 = vmatmul.mubr.f32.gmra.mrb[0].mxu0 %v402
    %v565 = vpop.f32.mrb[0].mxu0
    %v566 = vadd.f32 %v437, %v565
    %v567 = vpop.f32.mrb[0].mxu0
    %568 = vmatprep.mubr.f32.mxu0 0.0
    %569 = vmatmul.mubr.f32.gmra.mrb[0].mxu0 %v405
    %v570 = vpop.f32.mrb[0].mxu0
    %v571 = vadd.f32 %v437, %v570
    %v572 = vpop.f32.mrb[0].mxu0
    %573 = vmatprep.mubr.f32.mxu0 0.0
    %574 = vmatmul.mubr.f32.gmra.mrb[0].mxu0 %v410
    %v575 = vpop.f32.mrb[0].mxu0
    %v576 = vadd.f32 %v437, %v575
    %v577 = vpop.f32.mrb[0].mxu0
    %578 = vmatprep.mubr.f32.mxu0 0.0
    %579 = vmatmul.mubr.f32.gmra.mrb[0].mxu0 %v413
    %v580 = vpop.f32.mrb[0].mxu0
    %v581 = vadd.f32 %v437, %v580
    %v582 = vpop.f32.mrb[0].mxu0
    %583 = vdwg.mxu0
    %584 = vst [vmem:[#allocation8] sm:$0xff] %v506
    %585 = vst [vmem:[#allocation8 + $0x8] sm:$0xff] %v511
    %586 = vst [vmem:[#allocation8 + $0x10] sm:$0xff] %v516
    %587 = vst [vmem:[#allocation8 + $0x18] sm:$0xff] %v521
    %588 = vst [vmem:[#allocation8 + $0x20] sm:$0xff] %v526
    %589 = vst [vmem:[#allocation8 + $0x28] sm:$0xff] %v531
    %590 = vst [vmem:[#allocation8 + $0x30] sm:$0xff] %v536
    %591 = vst [vmem:[#allocation8 + $0x38] sm:$0xff] %v541
    %592 = vst [vmem:[#allocation8 + $0x40] sm:$0xff] %v546
    %593 = vst [vmem:[#allocation8 + $0x48] sm:$0xff] %v551
    %594 = vst [vmem:[#allocation8 + $0x50] sm:$0xff] %v556
    %595 = vst [vmem:[#allocation8 + $0x58] sm:$0xff] %v561
    %596 = vst [vmem:[#allocation8 + $0x60] sm:$0xff] %v566
    %597 = vst [vmem:[#allocation8 + $0x68] sm:$0xff] %v571
    %598 = vst [vmem:[#allocation8 + $0x70] sm:$0xff] %v576
    %599 = vst [vmem:[#allocation8 + $0x78] sm:$0xff] %v581
    // Predicated region
    $region34: #{tpu_custom_call.1} parent=1 // pred_check
      _
    $region35: #{tpu_custom_call.1} parent=1 // pred_check_branch
      %601 = sbr.rel (0) target = $region37
    $region36: #{tpu_custom_call.1} parent=1 // pred_region
      %s603 = ssub.s32 2048, 2048
      %604 = vsyncadd [#allocation4], %s603
      %s605 = sshll.u32 [#allocation8], 4
      %s606 = int_to_ptr.vmem [resolvable:$true] %s605
      %611 = dma.vmem_to_hbm [thread:$0]  %s606, 2048, %s5, [#allocation4], 128, 128, 8
    $region37: #{tpu_custom_call.1} parent=1 // pred_fallthru
      _
    // Predicated region
    $region38: #{tpu_custom_call.1} parent=1 // pred_check
      _
    $region39: #{tpu_custom_call.1} parent=1 // pred_check_branch
      %613 = sbr.rel (0) target = $region41
    $region40: #{tpu_custom_call.1} parent=1 // pred_region
      %614 = dma.done [#allocation4], 2048
    $region41: #{tpu_custom_call.1} parent=1 // pred_fallthru
      _
    %615 = vsyncpa [#allocation3], 1
    %616 = vsyncpa [#allocation6], 1
    %617 = vsyncpa [#allocation4], 1

</llo_original>
